<compile_context>
chip_gen: v6e
topology: v6e:2x2x1
jax: 0.10.0
libtpu: 0.0.40
codegen_flags: <defaults>
</compile_context>

<pallas_src>
import functools

import jax
import jax.numpy as jnp
from jax.experimental import pallas as pl
from jax.experimental.pallas import tpu as pltpu


def _nll_loghaz_tile_kernel(phi_ref, idx_ref, ev_ref, out_ref, acc_ref, *,
                            total_rows, tile_rows):
    s = pl.program_id(0)                      # megacore split index ("parallel")
    j = pl.program_id(1)                      # batch-tile index ("arbitrary")
    tiles_per_split = pl.num_programs(1)

    @pl.when(j == 0)
    def _init():
        acc_ref[0] = jnp.float32(0.0)

    phi = phi_ref[...].astype(jnp.float32)    # (TB, T)
    idx = idx_ref[...]                        # (TB, 1) int32
    ev = ev_ref[...].astype(jnp.float32)      # (TB, 1)

    TB, T = phi.shape
    t = jax.lax.broadcasted_iota(jnp.int32, (TB, T), 1)   # duration-bin index
    r = jax.lax.broadcasted_iota(jnp.int32, (TB, 1), 0)   # row-in-tile index

    # Mask rows that fall past the true batch (partial last tile and fully
    # padded / clamped tiles).
    logical_tile = s * tiles_per_split + j
    row_valid = ((logical_tile * tile_rows + r) < total_rows).astype(jnp.float32)

    # Numerically stable softplus(x) = BCE-with-logits(x, 0)
    sp = jnp.maximum(phi, 0.0) + jnp.log1p(jnp.exp(-jnp.abs(phi)))
    le = (t <= idx).astype(jnp.float32)
    cum_at_idx = jnp.sum(sp * le, axis=1, keepdims=True)                 # (TB,1)
    phi_at_idx = jnp.sum(jnp.where(t == idx, phi, 0.0), axis=1, keepdims=True)
    per_sample = cum_at_idx - ev * phi_at_idx                            # (TB,1)

    acc_ref[0] += jnp.sum(per_sample * row_valid)

    @pl.when(j == tiles_per_split - 1)
    def _finalize():
        # lane-dense (1,8,128) store, once per split
        out_ref[...] = jnp.full(out_ref.shape, acc_ref[0], dtype=jnp.float32)


def loss_ae_log_haz(phi, target_loghaz, *, tile_rows=None):
    """phi: (B, T) float32/bfloat16 logits; target_loghaz: (B, 2) (duration idx, event).
    Returns scalar mean NLL logistic-hazard loss."""
    B, T = phi.shape
    idx = target_loghaz[:, 0].astype(jnp.int32).reshape(B, 1)
    ev = target_loghaz[:, 1].astype(jnp.float32).reshape(B, 1)

    if tile_rows is None:
        # ~2 MiB f32 per phi tile -> double-buffered tiles stay well inside the
        # scoped VMEM limit on every generation (v7x has only 64 MiB physical).
        budget_rows = max(8, (2 * 1024 * 1024) // (T * 4))
        tile_rows = min(512, budget_rows)
        tile_rows = max(8, tile_rows - tile_rows % 8)

    TB = B if B <= tile_rows else tile_rows   # full dim, or sublane-aligned tile

    num_tiles = pl.cdiv(B, TB)
    nsplit = 2 if num_tiles >= 2 else 1       # 2 TCs on v7x; no-op on v5e/v6e
    tiles_per_split = pl.cdiv(num_tiles, nsplit)

    def tile_map(s, j):
        # Clamp so logically-padded tiles re-read the last real tile (they are
        # then fully masked in-kernel) instead of DMA-ing out of bounds.
        return (jnp.minimum(s * tiles_per_split + j, num_tiles - 1), 0)

    kernel = functools.partial(_nll_loghaz_tile_kernel,
                               total_rows=B, tile_rows=TB)

    phi_bytes = phi.size * phi.dtype.itemsize
    cost = pl.CostEstimate(flops=8 * B * T,
                           transcendentals=2 * B * T,
                           bytes_accessed=phi_bytes + 8 * B + nsplit * 8 * 128 * 4)

    partials = pl.pallas_call(
        kernel,
        out_shape=jax.ShapeDtypeStruct((nsplit, 8, 128), jnp.float32),
        grid_spec=pltpu.PrefetchScalarGridSpec(
            num_scalar_prefetch=0,
            grid=(nsplit, tiles_per_split),
            in_specs=[
                pl.BlockSpec((TB, T), tile_map),   # phi tile
                pl.BlockSpec((TB, 1), tile_map),   # idx tile (int32)
                pl.BlockSpec((TB, 1), tile_map),   # events tile (f32)
            ],
            out_specs=pl.BlockSpec((1, 8, 128), lambda s, j: (s, 0, 0)),
            scratch_shapes=[pltpu.SMEM((1,), jnp.float32)],
        ),
        compiler_params=pltpu.CompilerParams(
            dimension_semantics=("parallel", "arbitrary"),
            vmem_limit_bytes=32 * 1024 * 1024,
        ),
        cost_estimate=cost,
    )(phi, idx, ev)

    # per-split partial sums -> mean over the true batch size
    return jnp.sum(partials[:, 0, 0]) / jnp.float32(B)


def _loss_ref(phi, target_loghaz):
    """Pure-JAX reference of the same math (pycox NLLLogistiHazardLoss)."""
    phi = phi.astype(jnp.float32)
    idx = target_loghaz[:, 0].astype(jnp.int32)[:, None]
    ev = target_loghaz[:, 1].astype(jnp.float32)[:, None]
    T = phi.shape[1]
    t = jnp.arange(T)[None, :]
    y = jnp.where(t == idx, ev, 0.0)
    bce = jnp.maximum(phi, 0.0) - phi * y + jnp.log1p(jnp.exp(-jnp.abs(phi)))
    return jnp.mean(jnp.sum(jnp.where(t <= idx, bce, 0.0), axis=1))


if __name__ == "__main__":
    # Test 1: module-sized inputs (single tile, single split).
    k1, k2, k3 = jax.random.split(jax.random.PRNGKey(0), 3)
    B, T = 8, 128
    phi = jax.random.normal(k1, (B, T), dtype=jnp.float32)
    idx_durations = jax.random.randint(k2, (B,), 0, T).astype(jnp.float32)
    events = jax.random.bernoulli(k3, 0.5, (B,)).astype(jnp.float32)
    target_loghaz = jnp.stack([idx_durations, events], axis=1)  # (B, 2)

    loss = loss_ae_log_haz(phi, target_loghaz)
    jax.block_until_ready(loss)
    ref = _loss_ref(phi, target_loghaz)
    assert jnp.allclose(loss, ref, rtol=1e-5, atol=1e-5), (loss, ref)

    # Test 2: exercises batch tiling, a partial last tile, a fully-masked
    # clamped padding tile and the 2-way megacore split.
    k4, k5, k6 = jax.random.split(jax.random.PRNGKey(1), 3)
    B2, T2 = 20, 64
    phi2 = jax.random.normal(k4, (B2, T2), dtype=jnp.float32)
    idx2 = jax.random.randint(k5, (B2,), 0, T2).astype(jnp.float32)
    ev2 = jax.random.bernoulli(k6, 0.5, (B2,)).astype(jnp.float32)
    target2 = jnp.stack([idx2, ev2], axis=1)

    loss2 = loss_ae_log_haz(phi2, target2, tile_rows=8)
    jax.block_until_ready(loss2)
    ref2 = _loss_ref(phi2, target2)
    assert jnp.allclose(loss2, ref2, rtol=1e-5, atol=1e-5), (loss2, ref2)

    print("KERNEL_OK")
</pallas_src>

<mosaic_0001>
module attributes {stable_mosaic.version = 11 : i64} {
  func.func @_nll_loghaz_tile_kernel(%arg0: i32, %arg1: i32, %arg2: memref<8x128xf32, #tpu.memory_space<vmem>>, %arg3: memref<8x1xi32, #tpu.memory_space<vmem>>, %arg4: memref<8x1xf32, #tpu.memory_space<vmem>>, %arg5: memref<1x8x128xf32, #tpu.memory_space<vmem>>, %arg6: memref<1xf32, #tpu.memory_space<smem>>) attributes {dimension_semantics = [#tpu.dimension_semantics<parallel>, #tpu.dimension_semantics<arbitrary>], iteration_bounds = array<i64: 1, 1>, scalar_prefetch = 0 : i64, scratch_operands = 1 : i64, tpu.core_type = #tpu.core_type<tc>, window_params = [{transform_indices = @transform_0, window_bounds = array<i64: 8, 128>}, {transform_indices = @transform_1, window_bounds = array<i64: 8, 1>}, {transform_indices = @transform_2, window_bounds = array<i64: 8, 1>}, {transform_indices = @transform_3, window_bounds = array<i64: 1, 8, 128>}]} {
    %c0_i32 = arith.constant 0 : i32
    %0 = arith.cmpi eq, %arg1, %c0_i32 : i32
    %1 = arith.extui %0 : i1 to i32
    %c0_i32_0 = arith.constant 0 : i32
    %2 = arith.cmpi ne, %1, %c0_i32_0 : i32
    scf.if %2 {
      %cst_16 = arith.constant 0.000000e+00 : f32
      %c0_17 = arith.constant 0 : index
      %51 = memref.load %arg6[%c0_17] : memref<1xf32, #tpu.memory_space<smem>>
      memref.store %cst_16, %arg6[%c0_17] : memref<1xf32, #tpu.memory_space<smem>>
    } else {
    }
    %c0 = arith.constant 0 : index
    %c0_1 = arith.constant 0 : index
    %3 = vector.load %arg2[%c0, %c0_1] : memref<8x128xf32, #tpu.memory_space<vmem>>, vector<8x128xf32>
    %c0_2 = arith.constant 0 : index
    %c0_3 = arith.constant 0 : index
    %4 = vector.load %arg3[%c0_2, %c0_3] : memref<8x1xi32, #tpu.memory_space<vmem>>, vector<8x1xi32>
    %c0_4 = arith.constant 0 : index
    %c0_5 = arith.constant 0 : index
    %5 = vector.load %arg4[%c0_4, %c0_5] : memref<8x1xf32, #tpu.memory_space<vmem>>, vector<8x1xf32>
    %6 = tpu.iota {dimensions = array<i32: 1>} : vector<8x128xi32>
    %7 = tpu.iota {dimensions = array<i32: 0>} : vector<8x1xi32>
    %c1_i32 = arith.constant 1 : i32
    %8 = arith.muli %arg0, %c1_i32 : i32
    %9 = arith.addi %8, %arg1 : i32
    %c8_i32 = arith.constant 8 : i32
    %10 = arith.muli %9, %c8_i32 : i32
    %11 = vector.broadcast %10 : i32 to vector<8x1xi32>
    %12 = arith.addi %11, %7 : vector<8x1xi32>
    %c8_i32_6 = arith.constant 8 : i32
    %13 = vector.broadcast %c8_i32_6 : i32 to vector<8x1xi32>
    %14 = arith.cmpi slt, %12, %13 : vector<8x1xi32>
    %15 = arith.extui %14 : vector<8x1xi1> to vector<8x1xi32>
    %16 = arith.sitofp %15 : vector<8x1xi32> to vector<8x1xf32>
    %cst = arith.constant 0.000000e+00 : f32
    %17 = vector.broadcast %cst : f32 to vector<8x128xf32>
    %18 = arith.maximumf %3, %17 : vector<8x128xf32>
    %19 = math.absf %3 : vector<8x128xf32>
    %cst_7 = arith.constant 0.000000e+00 : f32
    %20 = vector.broadcast %cst_7 : f32 to vector<8x128xf32>
    %21 = arith.subf %20, %19 : vector<8x128xf32>
    %22 = math.exp %21 : vector<8x128xf32>
    %23 = math.log1p %22 : vector<8x128xf32>
    %24 = arith.addf %18, %23 : vector<8x128xf32>
    %25 = vector.broadcast %4 : vector<8x1xi32> to vector<8x128xi32>
    %26 = arith.cmpi sle, %6, %25 : vector<8x128xi32>
    %27 = arith.extui %26 : vector<8x128xi1> to vector<8x128xi32>
    %28 = arith.sitofp %27 : vector<8x128xi32> to vector<8x128xf32>
    %29 = arith.mulf %24, %28 : vector<8x128xf32>
    %cst_8 = arith.constant dense<0.000000e+00> : vector<8xf32>
    %30 = vector.multi_reduction <add>, %29, %cst_8 [1] : vector<8x128xf32> to vector<8xf32>
    %31 = vector.shape_cast %30 : vector<8xf32> to vector<8x1xf32>
    %32 = vector.broadcast %4 : vector<8x1xi32> to vector<8x128xi32>
    %33 = arith.cmpi eq, %6, %32 : vector<8x128xi32>
    %cst_9 = arith.constant 0.000000e+00 : f32
    %34 = vector.broadcast %cst_9 : f32 to vector<8x128xf32>
    %35 = arith.select %33, %3, %34 : vector<8x128xi1>, vector<8x128xf32>
    %cst_10 = arith.constant dense<0.000000e+00> : vector<8xf32>
    %36 = vector.multi_reduction <add>, %35, %cst_10 [1] : vector<8x128xf32> to vector<8xf32>
    %37 = vector.shape_cast %36 : vector<8xf32> to vector<8x1xf32>
    %38 = arith.mulf %5, %37 : vector<8x1xf32>
    %39 = arith.subf %31, %38 : vector<8x1xf32>
    %c0_11 = arith.constant 0 : index
    %40 = memref.load %arg6[%c0_11] : memref<1xf32, #tpu.memory_space<smem>>
    %41 = arith.mulf %39, %16 : vector<8x1xf32>
    %42 = vector.shape_cast %41 : vector<8x1xf32> to vector<1x8x1xf32>
    %cst_12 = arith.constant dense<0.000000e+00> : vector<1xf32>
    %43 = vector.multi_reduction <add>, %42, %cst_12 [1, 2] : vector<1x8x1xf32> to vector<1xf32>
    %44 = vector.shape_cast %43 : vector<1xf32> to vector<1x1x1xf32>
    %45 = vector.extract %44[0, 0, 0] : f32 from vector<1x1x1xf32>
    %46 = arith.addf %40, %45 : f32
    %c0_13 = arith.constant 0 : index
    %47 = memref.load %arg6[%c0_13] : memref<1xf32, #tpu.memory_space<smem>>
    memref.store %46, %arg6[%c0_13] : memref<1xf32, #tpu.memory_space<smem>>
    %c0_i32_14 = arith.constant 0 : i32
    %48 = arith.cmpi eq, %arg1, %c0_i32_14 : i32
    %49 = arith.extui %48 : i1 to i32
    %c0_i32_15 = arith.constant 0 : i32
    %50 = arith.cmpi ne, %49, %c0_i32_15 : i32
    scf.if %50 {
      %c0_16 = arith.constant 0 : index
      %51 = memref.load %arg6[%c0_16] : memref<1xf32, #tpu.memory_space<smem>>
      %52 = vector.broadcast %51 : f32 to vector<1x8x128xf32>
      %c0_17 = arith.constant 0 : index
      %c0_18 = arith.constant 0 : index
      %c0_19 = arith.constant 0 : index
      %53 = vector.load %arg5[%c0_17, %c0_18, %c0_19] : memref<1x8x128xf32, #tpu.memory_space<vmem>>, vector<1x8x128xf32>
      tpu.vector_store %arg5[%c0_17, %c0_18, %c0_19], %52 {strides = array<i32>} : memref<1x8x128xf32, #tpu.memory_space<vmem>>, vector<1x8x128xf32>,
    } else {
    }
    return
  }
  func.func @transform_0(%arg0: i32, %arg1: i32) -> (i32, i32) {
    %c1_i32 = arith.constant 1 : i32
    %0 = arith.muli %arg0, %c1_i32 : i32
    %1 = arith.addi %0, %arg1 : i32
    %c0_i32 = arith.constant 0 : i32
    %2 = arith.minsi %1, %c0_i32 : i32
    %c0_i32_0 = arith.constant 0 : i32
    %c0_i32_1 = arith.constant 0 : i32
    return %2, %c0_i32_0 : i32, i32
  }
  func.func @transform_1(%arg0: i32, %arg1: i32) -> (i32, i32) {
    %c1_i32 = arith.constant 1 : i32
    %0 = arith.muli %arg0, %c1_i32 : i32
    %1 = arith.addi %0, %arg1 : i32
    %c0_i32 = arith.constant 0 : i32
    %2 = arith.minsi %1, %c0_i32 : i32
    %c0_i32_0 = arith.constant 0 : i32
    %c0_i32_1 = arith.constant 0 : i32
    return %2, %c0_i32_0 : i32, i32
  }
  func.func @transform_2(%arg0: i32, %arg1: i32) -> (i32, i32) {
    %c1_i32 = arith.constant 1 : i32
    %0 = arith.muli %arg0, %c1_i32 : i32
    %1 = arith.addi %0, %arg1 : i32
    %c0_i32 = arith.constant 0 : i32
    %2 = arith.minsi %1, %c0_i32 : i32
    %c0_i32_0 = arith.constant 0 : i32
    %c0_i32_1 = arith.constant 0 : i32
    return %2, %c0_i32_0 : i32, i32
  }
  func.func @transform_3(%arg0: i32, %arg1: i32) -> (i32, i32, i32) {
    %c0_i32 = arith.constant 0 : i32
    %c0_i32_0 = arith.constant 0 : i32
    %c0_i32_1 = arith.constant 0 : i32
    return %arg0, %c0_i32, %c0_i32_0 : i32, i32, i32
  }
}

</mosaic_0001>

<llo_original>
// kernel: tpu_custom_call.1
$region0: #{tpu_custom_call.1}
  #allocation0 [shape = 'u32[]', space=smem, size = 0x4, offset = 0x4, fixed_abs, tag = 'smem constant byte address 0x4 - core index']
  #allocation1 [shape = 'u32[144,128]{1,0:T(1,128)}', space=vmem, size = 0x12000, scoped, tag = 'internal scratch']
  #allocation2 [shape = 'f32[1]{0:T(128)}', space=smem, size = 0x200, scoped, tag = 'scratch operand']
  %s0 = inlined_call_operand.vmem [shape: f32[8,128], index: 0, kind: input, shape index: {}]
  %s1 = inlined_call_operand.vmem [shape: s32[8,1], index: 1, kind: input, shape index: {}]
  %s2 = inlined_call_operand.vmem [shape: f32[8,1], index: 2, kind: input, shape index: {}]
  %s3 = inlined_call_operand.hbm [shape: f32[1,8,128], index: 3, kind: output, shape index: {}]
  %s4 = sld [smem:[#allocation0]]
  $region30: #{tpu_custom_call.1} parent=0
    _
  %s6 = ssub.s32 1, %s4
  %s7 = scalar_select 0, %s6, %s4
  $region1: #{tpu_custom_call.1} parent=0
    #allocation3 [shape = 'u8[4096]{0}', space=vmem, size = 0x1000, scoped, tag = 'output window, operand 0, single buffered']
    #allocation4 [shape = 's32[1]{0}', space=sflag, size = 0x4, scoped, tag = 'scoped memory for tpu_custom_call.1']
    %8 = vsyncpa [#allocation4], 0
    // Predicated region
    $region2: #{tpu_custom_call.1} parent=1 // pred_check
      _
    $region3: #{tpu_custom_call.1} parent=1 // pred_check_branch
      %10 = sbr.rel (0) target = $region5
    $region4: #{tpu_custom_call.1} parent=1 // pred_region
      %s11 = sadd.s32 0, 0
      %p12 = scmp.lt.s32.totalorder %s11, 0
      %s13 = scalar_select %p12, %s11, 0
      %p14 = scmp.lt.s32.totalorder %s13, 0
      %s15 = scalar_select %p14, %s13, 0
      %s16 = smul.addr %s15, 8
      %s17 = scalar_lea.vmem %s0, %s16
      %s18 = sadd.s32 0, 0
      %p19 = scmp.lt.s32.totalorder %s18, 0
      %s20 = scalar_select %p19, %s18, 0
    $region5: #{tpu_custom_call.1} parent=1 // pred_fallthru
      _
    // Predicated region
    $region6: #{tpu_custom_call.1} parent=1 // pred_check
      _
    $region7: #{tpu_custom_call.1} parent=1 // pred_check_branch
      %22 = sbr.rel (0) target = $region9
    $region8: #{tpu_custom_call.1} parent=1 // pred_region
      %s23 = sadd.s32 0, 0
      %p24 = scmp.lt.s32.totalorder %s23, 0
      %s25 = scalar_select %p24, %s23, 0
      %p26 = scmp.lt.s32.totalorder %s25, 0
      %s27 = scalar_select %p26, %s25, 0
      %s28 = smul.addr %s27, 8
      %s29 = scalar_lea.vmem %s1, %s28
      %s30 = sadd.s32 0, 0
      %p31 = scmp.lt.s32.totalorder %s30, 0
      %s32 = scalar_select %p31, %s30, 0
    $region9: #{tpu_custom_call.1} parent=1 // pred_fallthru
      _
    // Predicated region
    $region10: #{tpu_custom_call.1} parent=1 // pred_check
      _
    $region11: #{tpu_custom_call.1} parent=1 // pred_check_branch
      %34 = sbr.rel (0) target = $region13
    $region12: #{tpu_custom_call.1} parent=1 // pred_region
      %s35 = sadd.s32 0, 0
      %p36 = scmp.lt.s32.totalorder %s35, 0
      %s37 = scalar_select %p36, %s35, 0
      %p38 = scmp.lt.s32.totalorder %s37, 0
      %s39 = scalar_select %p38, %s37, 0
      %s40 = smul.addr %s39, 8
      %s41 = scalar_lea.vmem %s2, %s40
      %s42 = sadd.s32 0, 0
      %p43 = scmp.lt.s32.totalorder %s42, 0
      %s44 = scalar_select %p43, %s42, 0
    $region13: #{tpu_custom_call.1} parent=1 // pred_fallthru
      _
    %s45 = sadd.s32 0, 0
    %p46 = scmp.lt.s32.totalorder %s45, 0
    %s47 = scalar_select %p46, %s45, 0
    %p48 = scmp.lt.s32.totalorder %s47, 0
    %s49 = scalar_select %p48, %s47, 0
    %s50 = smul.addr %s49, 8
    %s51 = scalar_lea.vmem %s0, %s50
    %s52 = sadd.s32 0, 0
    %p53 = scmp.lt.s32.totalorder %s52, 0
    %s54 = scalar_select %p53, %s52, 0
    %p55 = scmp.lt.s32.totalorder %s54, 0
    %s56 = scalar_select %p55, %s54, 0
    %s57 = smul.addr %s56, 8
    %s58 = scalar_lea.vmem %s1, %s57
    %s59 = sadd.s32 0, 0
    %p60 = scmp.lt.s32.totalorder %s59, 0
    %s61 = scalar_select %p60, %s59, 0
    %p62 = scmp.lt.s32.totalorder %s61, 0
    %s63 = scalar_select %p62, %s61, 0
    %s64 = smul.addr %s63, 8
    %s65 = scalar_lea.vmem %s2, %s64
    %s66 = sadd.s32 0, 0
    %p67 = scmp.lt.s32.totalorder %s66, 0
    %s68 = scalar_select %p67, %s66, 0
    %p69 = scmp.lt.s32.totalorder %s68, 0
    %s70 = scalar_select %p69, %s68, 0
    %s71 = smul.addr %s70, 8
    %s72 = scalar_lea.vmem %s0, %s71
    %s73 = sadd.s32 0, 0
    %p74 = scmp.lt.s32.totalorder %s73, 0
    %s75 = scalar_select %p74, %s73, 0
    %s76 = sadd.s32 0, 0
    %p77 = scmp.lt.s32.totalorder %s76, 0
    %s78 = scalar_select %p77, %s76, 0
    %p79 = scmp.lt.s32.totalorder %s78, 0
    %s80 = scalar_select %p79, %s78, 0
    %s81 = smul.addr %s80, 8
    %s82 = scalar_lea.vmem %s1, %s81
    %s83 = sadd.s32 0, 0
    %p84 = scmp.lt.s32.totalorder %s83, 0
    %s85 = scalar_select %p84, %s83, 0
    %s86 = sadd.s32 0, 0
    %p87 = scmp.lt.s32.totalorder %s86, 0
    %s88 = scalar_select %p87, %s86, 0
    %p89 = scmp.lt.s32.totalorder %s88, 0
    %s90 = scalar_select %p89, %s88, 0
    %s91 = smul.addr %s90, 8
    %s92 = scalar_lea.vmem %s2, %s91
    %s93 = sadd.s32 0, 0
    %p94 = scmp.lt.s32.totalorder %s93, 0
    %s95 = scalar_select %p94, %s93, 0
    %p96 = scmp.eq.s32.totalorder 0, 0
    // Predicated region
    $region14: #{tpu_custom_call.1} parent=1 // pred_check
      %p97 = pneg %p96
    $region15: #{tpu_custom_call.1} parent=1 // pred_check_branch
      %99 = sbr.rel (%p97) target = $region17
    $region16: #{tpu_custom_call.1} parent=1 // pred_region
      %s100 = scalar_lea.smem [#allocation2], 0
      %101 = sst [smem:[%s100]] 0.0
    $region17: #{tpu_custom_call.1} parent=1 // pred_fallthru
      _
    %v102 = vld [vmem:[%s72] sm:$0xff]
    %v103 = vld [vmem:[%s82] sm:$0xff]
    %v104 = vld [vmem:[%s92] sm:$0xff]
    %v105 = vlaneseq
    %v106 = vand.u32 %v105, 127
    %v107 = vlaneseq
    %v108 = vshrl.u32 %v107, 7
    %s109 = sadd.s32 0, 0
    %s110 = smul.u32 %s109, 8
    %v111 = vstv %s110
    %v112 = vadd.s32 %v111, %v108
    %vm113 = vcmp.lt.s32.totalorder %v112, 8
    %v114 = vsel %vm113, 1, 0
    %v115 = vcvt.s32.f32 %v114
    %v116 = vmax.f32 %v102, 0.0
    %v117 = vand.u32 2147483647, %v102
    %v118 = vsub.f32 0.0, %v117
    %v119 = vmul.f32 %v118, 1.442695
    %v120 = vpow.pop %v119
    %v121 = vadd.f32 %v120, 1.0
    %v122 = vlog2.pop %v121
    %v123 = vmul.f32 %v122, 0.6931472
    %v124 = vmul.f32 -0.5, %v120
    %v125 = vadd.f32 %v124, 1.0
    %v126 = vmul.f32 %v125, %v120
    %v127 = vand.u32 2147483647, %v120
    %vm128 = vcmp.lt.f32.partialorder %v127, 0.0004427343
    %v129 = vsel %vm128, %v126, %v123
    %v130 = vadd.f32 %v116, %v129
    %131 = vset.pattern.permute.xlu0 0
    %132 = vperm.xlu0 %131, %v103
    %v133 = vpop.permute.xlu0 %132
    %vm134 = vcmp.le.s32.totalorder %v106, %v133
    %v135 = vsel %vm134, 1, 0
    %v136 = vcvt.s32.f32 %v135
    %v137 = vmul.f32 %v130, %v136
    %138 = vadd.xlane.f32.xlu0 %v137
    %v139 = vpop.xlane.xlu0 %138
    %vm140 = vcmp.eq.s32.totalorder %v106, %v133
    %v141 = vsel %vm140, %v102, 0.0
    %142 = vadd.xlane.f32.xlu0 %v141
    %v143 = vpop.xlane.xlu0 %142
    %v144 = vmul.f32 %v104, %v143
    %v145 = vsub.f32 %v139, %v144
    %s146 = sld [smem:[#allocation2]]
    %v147 = vmul.f32 %v145, %v115
    %vm148 = vcmask 7168
    %v149 = vsel %vm148, %v147, 0.0
    %150 = vadd.xlane.f32.xlu0 %v149
    %v151 = vpop.xlane.xlu0 %150
    %v152 = vrot.slane %v151, 4
    %v153 = vadd.f32 %v151, %v152
    %v154 = vrot.slane %v153, 2
    %v155 = vadd.f32 %v153, %v154
    %v156 = vrot.slane %v155, 1
    %v157 = vadd.f32 %v155, %v156
    %s158 = vtos %v157
    %s159 = sadd.f32 %s146, %s158
    %s160 = scalar_lea.smem [#allocation2], 0
    %161 = sst [smem:[%s160]] %s159
    // Predicated region
    $region18: #{tpu_custom_call.1} parent=1 // pred_check
      %p162 = pneg %p96
    $region19: #{tpu_custom_call.1} parent=1 // pred_check_branch
      %164 = sbr.rel (%p162) target = $region21
    $region20: #{tpu_custom_call.1} parent=1 // pred_region
      %s165 = sld [smem:[#allocation2]]
      %v166 = vstv %s165
      %167 = vst [vmem:[#allocation3] sm:$0xff] %v166
    $region21: #{tpu_custom_call.1} parent=1 // pred_fallthru
      _
    // Predicated region
    $region22: #{tpu_custom_call.1} parent=1 // pred_check
      _
    $region23: #{tpu_custom_call.1} parent=1 // pred_check_branch
      %169 = sbr.rel (0) target = $region25
    $region24: #{tpu_custom_call.1} parent=1 // pred_region
      %s171 = ssub.s32 128, 128
      %172 = vsyncadd [#allocation4], %s171
      %s174 = sshll.u32 [#allocation3], 4
      %s175 = int_to_ptr.vmem [resolvable:$true] %s174
      %177 = dma.vmem_to_hbm [thread:$0]  %s175, 128, %s3, [#allocation4]
    $region25: #{tpu_custom_call.1} parent=1 // pred_fallthru
      _
    // Predicated region
    $region26: #{tpu_custom_call.1} parent=1 // pred_check
      _
    $region27: #{tpu_custom_call.1} parent=1 // pred_check_branch
      %179 = sbr.rel (0) target = $region29
    $region28: #{tpu_custom_call.1} parent=1 // pred_region
      %180 = dma.done [#allocation4], 128
    $region29: #{tpu_custom_call.1} parent=1 // pred_fallthru
      _
    %181 = vsyncpa [#allocation4], 1

</llo_original>
